<compile_context>
chip_gen: v7x
topology: tpu7x:2x2x1
jax: 0.10.0
libtpu: 0.0.40
codegen_flags: <defaults>
</compile_context>

<pallas_src>
import functools

import jax
import jax.numpy as jnp
import numpy as np
from jax.experimental import pallas as pl
from jax.experimental.pallas import tpu as pltpu

_LANE = 128


def _round_up(v, m):
    return ((v + m - 1) // m) * m


def _cdiv(a, b):
    return -(-a // b)


def _sublane(dtype):
    # bf16 packs two rows per 32-bit sublane -> use 16-row granularity.
    return 16 if np.dtype(dtype).itemsize < 4 else 8


def _pad2d(a, rows, cols):
    r, c = a.shape
    if r == rows and c == cols:
        return a
    return jnp.pad(a, ((0, rows - r), (0, cols - c)))


def _pick_tile(dim_p, max_tile, gran):
    """Largest tile <= max_tile dividing dim_p (dim_p is a multiple of gran)."""
    t = min(max_tile, dim_p)
    t = max(gran, (t // gran) * gran)
    while dim_p % t:
        t -= gran
    return t


def _resident_spec(shape, index_map):
    """BlockSpec for a block whose index never changes: single-buffer it so the
    weight lives once in VMEM instead of being duplicated by double-buffering."""
    try:
        return pl.BlockSpec(shape, index_map, pipeline_mode=pl.Buffered(1))
    except Exception:  # older jax without pipeline_mode / Buffered
        return pl.BlockSpec(shape, index_map)


def _vmem_budgets():
    """Generation-aware VMEM sizing.

    Returns (vmem_limit_bytes, fused_budget_bytes, min_batch_tiles)."""
    vmem_cap = 64 * 1024 * 1024            # conservative default (v7x per-TC)
    try:
        vmem_cap = int(pltpu.get_tpu_info().vmem_capacity_bytes)
    except Exception:
        pass
    if vmem_cap >= 96 * 1024 * 1024:       # v5e / v6e: 128 MiB per TensorCore
        return 100 * 1024 * 1024, 72 * 1024 * 1024, 1
    # v7x: 64 MiB per TC, 2 TCs/chip -> leave headroom, want >=2 batch tiles.
    return 52 * 1024 * 1024, 32 * 1024 * 1024, 2


# ----------------------------------------------------------------------------
# Fused MLP: the whole Linear -> ReLU -> ... -> Linear stack in one kernel.
#   refs = (x_ref, w0_ref, b0_ref, w1_ref, b1_ref, ..., o_ref)
# ----------------------------------------------------------------------------
def _fused_mlp_kernel(*refs, num_layers):
    x_ref = refs[0]
    o_ref = refs[-1]
    h = x_ref[...]                                    # compute-dtype [tm, D0_p]
    for li in range(num_layers):
        w_ref = refs[1 + 2 * li]
        b_ref = refs[2 + 2 * li]
        y = jnp.dot(h, w_ref[...], preferred_element_type=jnp.float32)  # MXU
        y = y + b_ref[...]                            # f32 bias epilogue (VPU)
        if li < num_layers - 1:
            y = jnp.maximum(y, 0.0)
            h = y.astype(w_ref.dtype)                 # back to bf16 for next MXU op
        else:
            h = y
    o_ref[...] = h.astype(o_ref.dtype)


def _fused_plan(batch, layers, compute_dtype, block_m, min_batch_tiles):
    """Shared plan for the fused path: (padded dims, padded M, batch tile)."""
    dims = [layers[0][0].shape[0]] + [w.shape[1] for (w, _) in layers]
    dims_p = [_round_up(d, _LANE) for d in dims]
    sub = _sublane(compute_dtype)
    m_p = _round_up(max(batch, sub), sub)
    tm = min(block_m, m_p)
    if min_batch_tiles > 1 and m_p >= min_batch_tiles * sub:
        # v7x megacore: make sure there are >= min_batch_tiles grid steps.
        tm = min(tm, _round_up(_cdiv(m_p, min_batch_tiles), sub))
    tm = _round_up(tm, sub)
    m_p = _round_up(m_p, tm)
    return dims_p, m_p, tm


def _fused_vmem_estimate(batch, layers, compute_dtype, block_m, min_batch_tiles):
    dims_p, m_p, tm = _fused_plan(batch, layers, compute_dtype, block_m,
                                  min_batch_tiles)
    isz = np.dtype(compute_dtype).itemsize
    n = len(layers)
    # Weights/biases are single-buffered (Buffered(1)): counted once.
    w_bytes = sum(dims_p[i] * dims_p[i + 1] * isz + dims_p[i + 1] * 4
                  for i in range(n))
    # Per-layer live set: bf16 input act + f32 matmul result + bf16 copy of it.
    act_bytes = max(tm * (dims_p[i] * isz + dims_p[i + 1] * (4 + isz))
                    for i in range(n))
    # x / out blocks are pipeline double-buffered.
    io_bytes = 2 * tm * dims_p[0] * isz + 2 * tm * dims_p[-1] * 4
    return w_bytes + act_bytes + io_bytes


def fused_mlp_forward(x, layers, *, compute_dtype=jnp.bfloat16, block_m=512,
                      min_batch_tiles=1, vmem_limit_bytes=52 * 1024 * 1024):
    batch = x.shape[0]
    num_layers = len(layers)
    dims = [layers[0][0].shape[0]] + [w.shape[1] for (w, _) in layers]
    dims_p, m_p, tm = _fused_plan(batch, layers, compute_dtype, block_m,
                                  min_batch_tiles)

    x_p = _pad2d(x, m_p, dims_p[0]).astype(compute_dtype)
    params = []
    for li, (w, b) in enumerate(layers):
        params.append(_pad2d(w, dims_p[li], dims_p[li + 1]).astype(compute_dtype))
        params.append(_pad2d(b.reshape(1, -1), 1, dims_p[li + 1]).astype(jnp.float32))

    in_specs = [pl.BlockSpec((tm, dims_p[0]), lambda i: (i, 0))]
    for li in range(num_layers):
        in_specs.append(_resident_spec((dims_p[li], dims_p[li + 1]), lambda i: (0, 0)))
        in_specs.append(_resident_spec((1, dims_p[li + 1]), lambda i: (0, 0)))
    out_specs = pl.BlockSpec((tm, dims_p[-1]), lambda i: (i, 0))

    isz = np.dtype(compute_dtype).itemsize
    flops = 2 * m_p * sum(dims_p[i] * dims_p[i + 1] for i in range(num_layers))
    bytes_accessed = (m_p * dims_p[0] * isz
                      + sum(int(np.prod(p.shape)) * p.dtype.itemsize for p in params)
                      + m_p * dims_p[-1] * 4)

    out_p = pl.pallas_call(
        functools.partial(_fused_mlp_kernel, num_layers=num_layers),
        out_shape=jax.ShapeDtypeStruct((m_p, dims_p[-1]), jnp.float32),
        grid=(m_p // tm,),
        in_specs=in_specs,
        out_specs=out_specs,
        compiler_params=pltpu.CompilerParams(
            dimension_semantics=("parallel",),
            vmem_limit_bytes=vmem_limit_bytes,
        ),
        cost_estimate=pl.CostEstimate(
            flops=int(flops), transcendentals=0,
            bytes_accessed=int(bytes_accessed)),
    )(x_p, *params)

    return out_p[:batch, :dims[-1]]


# ----------------------------------------------------------------------------
# Tiled single-layer fallback: y = act(x @ w + b) over an (M, N, K) grid with a
# float32 VMEM accumulator; bias/ReLU applied once at the last K step.
# Operates on PADDED activations so layers chain without HBM round-trips.
# ----------------------------------------------------------------------------
def _tiled_linear_kernel(x_ref, w_ref, b_ref, o_ref, acc_ref, *, apply_relu):
    @pl.when(pl.program_id(2) == 0)
    def _():
        acc_ref[...] = jnp.zeros_like(acc_ref)

    acc_ref[...] += jnp.dot(x_ref[...], w_ref[...],
                            preferred_element_type=jnp.float32)

    @pl.when(pl.program_id(2) == pl.num_programs(2) - 1)
    def _():
        y = acc_ref[...] + b_ref[...]          # bias folded into finalize only
        if apply_relu:
            y = jnp.maximum(y, 0.0)
        o_ref[...] = y.astype(o_ref.dtype)


def tiled_linear_padded(x_p, w, b, *, apply_relu, out_dtype,
                        compute_dtype=jnp.bfloat16,
                        vmem_limit_bytes=52 * 1024 * 1024,
                        max_tm=512, max_tn=512, max_tk=512):
    """x_p is already padded (rows multiple of sublane gran, cols multiple of
    128, zero padding).  Returns the PADDED (m_p, n_p) result in out_dtype."""
    m_p, k_p = x_p.shape
    _, d_out = w.shape
    n_p = _round_up(d_out, _LANE)
    sub = _sublane(compute_dtype)

    tm = _pick_tile(m_p, max_tm, sub)
    tk = _pick_tile(k_p, max_tk, _LANE)
    tn = _pick_tile(n_p, max_tn, _LANE)

    w_p = _pad2d(w, k_p, n_p).astype(compute_dtype)     # zero rows for padded K
    b_p = _pad2d(b.reshape(1, -1), 1, n_p).astype(jnp.float32)

    isz = np.dtype(compute_dtype).itemsize
    out_isz = np.dtype(out_dtype).itemsize
    out_p = pl.pallas_call(
        functools.partial(_tiled_linear_kernel, apply_relu=apply_relu),
        out_shape=jax.ShapeDtypeStruct((m_p, n_p), out_dtype),
        grid=(m_p // tm, n_p // tn, k_p // tk),
        in_specs=[
            pl.BlockSpec((tm, tk), lambda i, j, k: (i, k)),
            pl.BlockSpec((tk, tn), lambda i, j, k: (k, j)),
            pl.BlockSpec((1, tn), lambda i, j, k: (0, j)),
        ],
        out_specs=pl.BlockSpec((tm, tn), lambda i, j, k: (i, j)),
        scratch_shapes=[pltpu.VMEM((tm, tn), jnp.float32)],
        compiler_params=pltpu.CompilerParams(
            dimension_semantics=("parallel", "parallel", "arbitrary"),
            vmem_limit_bytes=vmem_limit_bytes,
        ),
        cost_estimate=pl.CostEstimate(
            flops=int(2 * m_p * k_p * n_p),
            transcendentals=0,
            bytes_accessed=int((m_p * k_p + k_p * n_p) * isz + n_p * 4
                               + m_p * n_p * out_isz),
        ),
    )(x_p, w_p, b_p)
    return out_p


# ----------------------------------------------------------------------------
# BaseModel-equivalent wrapper (concrete MLP realization)
# ----------------------------------------------------------------------------
class BaseModelConfig:
    def __init__(self, input_dim, hidden_dim, output_dim, num_hidden_layers=1):
        self.input_dim = input_dim
        self.hidden_dim = hidden_dim
        self.output_dim = output_dim
        self.num_hidden_layers = num_hidden_layers


class BaseModelPallas:
    def __init__(self, config: BaseModelConfig, key, compute_dtype=jnp.bfloat16):
        self.config = config
        self.compute_dtype = compute_dtype
        self._key = key
        self.layers = self._build_layers(key)
        (self._vmem_limit, self._fused_budget,
         self._min_batch_tiles) = _vmem_budgets()

    def _build_layers(self, key):
        # Mirrors nn.Linear default init (uniform in +-1/sqrt(fan_in)),
        # deterministic from the provided PRNG key.  Weights stored as
        # [in_features, out_features] so kernels compute y = x @ W + b.
        dims = ([self.config.input_dim]
                + [self.config.hidden_dim] * self.config.num_hidden_layers
                + [self.config.output_dim])
        layers = []
        for i in range(len(dims) - 1):
            d_in, d_out = dims[i], dims[i + 1]
            key, kw, kb = jax.random.split(key, 3)
            bound = 1.0 / float(np.sqrt(d_in))
            w = jax.random.uniform(kw, (d_in, d_out), jnp.float32, -bound, bound)
            b = jax.random.uniform(kb, (d_out,), jnp.float32, -bound, bound)
            layers.append((w, b))
        return layers

    def forward(self, x, force_tiled=False):
        n = len(self.layers)
        if not force_tiled:
            # Prefer the largest batch tile whose fused footprint fits VMEM.
            for bm in (512, 256, 128):
                est = _fused_vmem_estimate(x.shape[0], self.layers,
                                           self.compute_dtype, bm,
                                           self._min_batch_tiles)
                if est <= self._fused_budget:
                    return fused_mlp_forward(
                        x, self.layers, compute_dtype=self.compute_dtype,
                        block_m=bm, min_batch_tiles=self._min_batch_tiles,
                        vmem_limit_bytes=self._vmem_limit)

        # Tiled per-layer fallback: activations stay padded (and bf16 for all
        # but the final layer) across layers -> no per-layer HBM pad/slice/cast.
        batch, d_in = x.shape
        sub = _sublane(self.compute_dtype)
        m_p = _round_up(max(batch, sub), sub)
        k_p = _round_up(d_in, _LANE)
        h_p = _pad2d(x, m_p, k_p).astype(self.compute_dtype)
        for i, (w, b) in enumerate(self.layers):
            is_last = i == n - 1
            h_p = tiled_linear_padded(
                h_p, w, b, apply_relu=not is_last,
                out_dtype=jnp.float32 if is_last else self.compute_dtype,
                compute_dtype=self.compute_dtype,
                vmem_limit_bytes=self._vmem_limit)
        return h_p[:batch, :self.layers[-1][0].shape[1]]

    def get_num_parameters(self):
        return sum(int(w.size) + int(b.size) for (w, b) in self.layers)

    def reset_parameters(self):
        self.layers = self._build_layers(self._key)


def _reference_forward(layers, x, compute_dtype):
    """Pure-JAX reference matching the kernel precision path."""
    n = len(layers)
    h = x
    for i, (w, b) in enumerate(layers):
        y = jnp.dot(h.astype(compute_dtype), w.astype(compute_dtype),
                    preferred_element_type=jnp.float32)
        y = y + b.astype(jnp.float32)
        if i < n - 1:
            y = jnp.maximum(y, 0.0)
        h = y
    return h


if __name__ == "__main__":
    key = jax.random.PRNGKey(0)
    k_params, k_input, k_params2, k_input2 = jax.random.split(key, 4)

    # Test 1: small MLP -> fused single-kernel path (whole MLP in one pallas_call).
    config = BaseModelConfig(input_dim=32, hidden_dim=64, output_dim=16,
                             num_hidden_layers=1)
    model = BaseModelPallas(config, k_params)
    batch = 8
    x = jax.random.normal(k_input, (batch, config.input_dim), jnp.float32)

    out = jax.block_until_ready(model.forward(x))
    ref = _reference_forward(model.layers, x, model.compute_dtype)
    assert out.shape == (batch, config.output_dim)
    assert jnp.allclose(out, ref, atol=2e-2, rtol=2e-2), \
        float(jnp.max(jnp.abs(out - ref)))

    # Test 2: multi-layer model forced through the tiled (M, N, K) fallback path
    # (exercises K accumulation, bf16 padded intermediates, bias/ReLU finalize).
    config2 = BaseModelConfig(input_dim=512, hidden_dim=384, output_dim=160,
                              num_hidden_layers=2)
    model2 = BaseModelPallas(config2, k_params2)
    x2 = jax.random.normal(k_input2, (48, config2.input_dim), jnp.float32)

    out2 = jax.block_until_ready(model2.forward(x2, force_tiled=True))
    ref2 = _reference_forward(model2.layers, x2, model2.compute_dtype)
    assert out2.shape == (48, config2.output_dim)
    assert jnp.allclose(out2, ref2, atol=2e-2, rtol=2e-2), \
        float(jnp.max(jnp.abs(out2 - ref2)))

    print("KERNEL_OK")
</pallas_src>

<mosaic_0001>
module attributes {stable_mosaic.version = 11 : i64} {
  func.func @_fused_mlp_kernel(%arg0: i32, %arg1: memref<16x128xbf16, #tpu.memory_space<vmem>>, %arg2: memref<128x128xbf16, #tpu.memory_space<vmem>>, %arg3: memref<1x128xf32, #tpu.memory_space<vmem>>, %arg4: memref<128x128xbf16, #tpu.memory_space<vmem>>, %arg5: memref<1x128xf32, #tpu.memory_space<vmem>>, %arg6: memref<16x128xf32, #tpu.memory_space<vmem>>) attributes {dimension_semantics = [#tpu.dimension_semantics<parallel>], iteration_bounds = array<i64: 1>, scalar_prefetch = 0 : i64, scratch_operands = 0 : i64, tpu.core_type = #tpu.core_type<tc>, window_params = [{transform_indices = @transform_0, window_bounds = array<i64: 16, 128>}, {pipeline_mode = #tpu.pipeline_mode<synchronous>, transform_indices = @transform_1, window_bounds = array<i64: 128, 128>}, {pipeline_mode = #tpu.pipeline_mode<synchronous>, transform_indices = @transform_2, window_bounds = array<i64: 1, 128>}, {pipeline_mode = #tpu.pipeline_mode<synchronous>, transform_indices = @transform_3, window_bounds = array<i64: 128, 128>}, {pipeline_mode = #tpu.pipeline_mode<synchronous>, transform_indices = @transform_4, window_bounds = array<i64: 1, 128>}, {transform_indices = @transform_5, window_bounds = array<i64: 16, 128>}]} {
    %c0 = arith.constant 0 : index
    %c0_0 = arith.constant 0 : index
    %0 = vector.load %arg1[%c0, %c0_0] : memref<16x128xbf16, #tpu.memory_space<vmem>>, vector<16x128xbf16>
    %c0_1 = arith.constant 0 : index
    %c0_2 = arith.constant 0 : index
    %1 = vector.load %arg2[%c0_1, %c0_2] : memref<128x128xbf16, #tpu.memory_space<vmem>>, vector<128x128xbf16>
    %cst = arith.constant dense<0.000000e+00> : vector<16x128xf32>
    %2 = tpu.matmul %0, %1, %cst {dimension_numbers = #tpu.dot_dimension_numbers<[1], [0], [0], [1], [0, 0, 1, 1], [], []>} : vector<16x128xbf16>, vector<128x128xbf16>, vector<16x128xf32> -> vector<16x128xf32>
    %c0_3 = arith.constant 0 : index
    %c0_4 = arith.constant 0 : index
    %3 = vector.load %arg3[%c0_3, %c0_4] : memref<1x128xf32, #tpu.memory_space<vmem>>, vector<1x128xf32>
    %4 = vector.broadcast %3 : vector<1x128xf32> to vector<16x128xf32>
    %5 = arith.addf %2, %4 : vector<16x128xf32>
    %cst_5 = arith.constant 0.000000e+00 : f32
    %6 = vector.broadcast %cst_5 : f32 to vector<16x128xf32>
    %7 = arith.maximumf %5, %6 : vector<16x128xf32>
    %8 = arith.truncf %7 : vector<16x128xf32> to vector<16x128xbf16>
    %c0_6 = arith.constant 0 : index
    %c0_7 = arith.constant 0 : index
    %9 = vector.load %arg4[%c0_6, %c0_7] : memref<128x128xbf16, #tpu.memory_space<vmem>>, vector<128x128xbf16>
    %cst_8 = arith.constant dense<0.000000e+00> : vector<16x128xf32>
    %10 = tpu.matmul %8, %9, %cst_8 {dimension_numbers = #tpu.dot_dimension_numbers<[1], [0], [0], [1], [0, 0, 1, 1], [], []>} : vector<16x128xbf16>, vector<128x128xbf16>, vector<16x128xf32> -> vector<16x128xf32>
    %c0_9 = arith.constant 0 : index
    %c0_10 = arith.constant 0 : index
    %11 = vector.load %arg5[%c0_9, %c0_10] : memref<1x128xf32, #tpu.memory_space<vmem>>, vector<1x128xf32>
    %12 = vector.broadcast %11 : vector<1x128xf32> to vector<16x128xf32>
    %13 = arith.addf %10, %12 : vector<16x128xf32>
    %c0_11 = arith.constant 0 : index
    %c0_12 = arith.constant 0 : index
    %14 = vector.load %arg6[%c0_11, %c0_12] : memref<16x128xf32, #tpu.memory_space<vmem>>, vector<16x128xf32>
    tpu.vector_store %arg6[%c0_11, %c0_12], %13 {strides = array<i32>} : memref<16x128xf32, #tpu.memory_space<vmem>>, vector<16x128xf32>,
    return
  }
  func.func @transform_0(%arg0: i32) -> (i32, i32) {
    %c0_i32 = arith.constant 0 : i32
    %c0_i32_0 = arith.constant 0 : i32
    return %arg0, %c0_i32 : i32, i32
  }
  func.func @transform_1(%arg0: i32) -> (i32, i32) {
    %c0_i32 = arith.constant 0 : i32
    %c0_i32_0 = arith.constant 0 : i32
    %c0_i32_1 = arith.constant 0 : i32
    return %c0_i32, %c0_i32_0 : i32, i32
  }
  func.func @transform_2(%arg0: i32) -> (i32, i32) {
    %c0_i32 = arith.constant 0 : i32
    %c0_i32_0 = arith.constant 0 : i32
    %c0_i32_1 = arith.constant 0 : i32
    return %c0_i32, %c0_i32_0 : i32, i32
  }
  func.func @transform_3(%arg0: i32) -> (i32, i32) {
    %c0_i32 = arith.constant 0 : i32
    %c0_i32_0 = arith.constant 0 : i32
    %c0_i32_1 = arith.constant 0 : i32
    return %c0_i32, %c0_i32_0 : i32, i32
  }
  func.func @transform_4(%arg0: i32) -> (i32, i32) {
    %c0_i32 = arith.constant 0 : i32
    %c0_i32_0 = arith.constant 0 : i32
    %c0_i32_1 = arith.constant 0 : i32
    return %c0_i32, %c0_i32_0 : i32, i32
  }
  func.func @transform_5(%arg0: i32) -> (i32, i32) {
    %c0_i32 = arith.constant 0 : i32
    %c0_i32_0 = arith.constant 0 : i32
    return %arg0, %c0_i32 : i32, i32
  }
}

</mosaic_0001>

<llo_original>
// kernel: tpu_custom_call.1
$region0: #{tpu_custom_call.1}
  #allocation0 [shape = 'u32[]', space=smem, size = 0x4, offset = 0x4, fixed_abs, tag = 'smem constant byte address 0x4 - core index']
  #allocation1 [shape = 'u32[144,128]{1,0:T(1,128)}', space=vmem, size = 0x12000, scoped, tag = 'internal scratch']
  %s0 = inlined_call_operand.hbm [shape: bf16[16,128], index: 0, kind: input, shape index: {}]
  %s1 = inlined_call_operand.hbm [shape: bf16[128,128], index: 1, kind: input, shape index: {}]
  %s2 = inlined_call_operand.vmem [shape: f32[1,128], index: 2, kind: input, shape index: {}]
  %s3 = inlined_call_operand.hbm [shape: bf16[128,128], index: 3, kind: input, shape index: {}]
  %s4 = inlined_call_operand.vmem [shape: f32[1,128], index: 4, kind: input, shape index: {}]
  %s5 = inlined_call_operand.hbm [shape: f32[16,128], index: 5, kind: output, shape index: {}]
  %s6 = sld [smem:[#allocation0]]
  $region42: #{tpu_custom_call.1} parent=0
    _
  %s8 = ssub.s32 1, %s6
  %s9 = scalar_select 0, %s8, %s6
  $region1: #{tpu_custom_call.1} parent=0
    #allocation2 [shape = 'u8[4096]{0}', space=vmem, size = 0x1000, scoped, tag = 'input window, operand 0, single buffered']
    #allocation3 [shape = 's32[1]{0}', space=sflag, size = 0x4, scoped, tag = 'scoped memory for tpu_custom_call.1']
    #allocation4 [shape = 's32[1]{0}', space=sflag, size = 0x4, scoped, tag = 'scoped memory for tpu_custom_call.1']
    #allocation5 [shape = 'u8[32768]{0}', space=vmem, size = 0x8000, scoped, tag = 'input window, operand 1, single buffered']
    #allocation6 [shape = 's32[1]{0}', space=sflag, size = 0x4, scoped, tag = 'scoped memory for tpu_custom_call.1']
    #allocation7 [shape = 'u8[32768]{0}', space=vmem, size = 0x8000, scoped, tag = 'input window, operand 3, single buffered']
    #allocation8 [shape = 'u8[8192]{0}', space=vmem, size = 0x2000, scoped, tag = 'output window, operand 0, single buffered']
    %10 = vsyncpa [#allocation3], 0
    %11 = vsyncpa [#allocation6], 0
    %12 = vsyncpa [#allocation4], 0
    // Predicated region
    $region2: #{tpu_custom_call.1} parent=1 // pred_check
      _
    $region3: #{tpu_custom_call.1} parent=1 // pred_check_branch
      %14 = sbr.rel (0) target = $region5
    $region4: #{tpu_custom_call.1} parent=1 // pred_region
      %s16 = ssub.s32 128, 128
      %17 = vsyncadd [#allocation3], %s16
      %s18 = sshll.u32 [#allocation2], 4
      %s19 = int_to_ptr.vmem [resolvable:$true] %s18
      %24 = dma.hbm_to_vmem [thread:$0]  %s0, 128, %s19, [#allocation3], 64, 64, 4
    $region5: #{tpu_custom_call.1} parent=1 // pred_fallthru
      _
    // Predicated region
    $region6: #{tpu_custom_call.1} parent=1 // pred_check
      _
    $region7: #{tpu_custom_call.1} parent=1 // pred_check_branch
      %26 = sbr.rel (0) target = $region9
    $region8: #{tpu_custom_call.1} parent=1 // pred_region
      %s28 = ssub.s32 1024, 1024
      %29 = vsyncadd [#allocation6], %s28
      %s30 = sshll.u32 [#allocation5], 4
      %s31 = int_to_ptr.vmem [resolvable:$true] %s30
      %36 = dma.hbm_to_vmem [thread:$0]  %s1, 1024, %s31, [#allocation6], 64, 64, 4
    $region9: #{tpu_custom_call.1} parent=1 // pred_fallthru
      _
    // Predicated region
    $region10: #{tpu_custom_call.1} parent=1 // pred_check
      _
    $region11: #{tpu_custom_call.1} parent=1 // pred_check_branch
      %38 = sbr.rel (0) target = $region13
    $region12: #{tpu_custom_call.1} parent=1 // pred_region
      _
    $region13: #{tpu_custom_call.1} parent=1 // pred_fallthru
      _
    // Predicated region
    $region14: #{tpu_custom_call.1} parent=1 // pred_check
      _
    $region15: #{tpu_custom_call.1} parent=1 // pred_check_branch
      %40 = sbr.rel (0) target = $region17
    $region16: #{tpu_custom_call.1} parent=1 // pred_region
      %s42 = ssub.s32 1024, 1024
      %43 = vsyncadd [#allocation6], %s42
      %s44 = sshll.u32 [#allocation7], 4
      %s45 = int_to_ptr.vmem [resolvable:$true] %s44
      %50 = dma.hbm_to_vmem [thread:$0]  %s3, 1024, %s45, [#allocation6], 64, 64, 4
    $region17: #{tpu_custom_call.1} parent=1 // pred_fallthru
      _
    // Predicated region
    $region18: #{tpu_custom_call.1} parent=1 // pred_check
      _
    $region19: #{tpu_custom_call.1} parent=1 // pred_check_branch
      %52 = sbr.rel (0) target = $region21
    $region20: #{tpu_custom_call.1} parent=1 // pred_region
      _
    $region21: #{tpu_custom_call.1} parent=1 // pred_fallthru
      _
    // Predicated region
    $region22: #{tpu_custom_call.1} parent=1 // pred_check
      _
    $region23: #{tpu_custom_call.1} parent=1 // pred_check_branch
      %54 = sbr.rel (0) target = $region25
    $region24: #{tpu_custom_call.1} parent=1 // pred_region
      %55 = dma.done [#allocation3], 128
    $region25: #{tpu_custom_call.1} parent=1 // pred_fallthru
      _
    // Predicated region
    $region26: #{tpu_custom_call.1} parent=1 // pred_check
      _
    $region27: #{tpu_custom_call.1} parent=1 // pred_check_branch
      %57 = sbr.rel (0) target = $region29
    $region28: #{tpu_custom_call.1} parent=1 // pred_region
      %58 = dma.done [#allocation6], 1024
    $region29: #{tpu_custom_call.1} parent=1 // pred_fallthru
      _
    // Predicated region
    $region30: #{tpu_custom_call.1} parent=1 // pred_check
      _
    $region31: #{tpu_custom_call.1} parent=1 // pred_check_branch
      %60 = sbr.rel (0) target = $region33
    $region32: #{tpu_custom_call.1} parent=1 // pred_region
      %61 = dma.done [#allocation6], 1024
    $region33: #{tpu_custom_call.1} parent=1 // pred_fallthru
      _
    %v63 = vld [vmem:[#allocation2] sm:$0xf]
    %v64 = vld [vmem:[#allocation2 + $0x4] sm:$0xf]
    %v65 = vld [vmem:[#allocation5] sm:$0xf]
    %v66 = vld [vmem:[#allocation5 + $0x4] sm:$0xf]
    %v67 = vld [vmem:[#allocation5 + $0x8] sm:$0xf]
    %v68 = vld [vmem:[#allocation5 + $0xc] sm:$0xf]
    %v69 = vld [vmem:[#allocation5 + $0x10] sm:$0xf]
    %v70 = vld [vmem:[#allocation5 + $0x14] sm:$0xf]
    %v71 = vld [vmem:[#allocation5 + $0x18] sm:$0xf]
    %v72 = vld [vmem:[#allocation5 + $0x1c] sm:$0xf]
    %v73 = vld [vmem:[#allocation5 + $0x20] sm:$0xf]
    %v74 = vld [vmem:[#allocation5 + $0x24] sm:$0xf]
    %v75 = vld [vmem:[#allocation5 + $0x28] sm:$0xf]
    %v76 = vld [vmem:[#allocation5 + $0x2c] sm:$0xf]
    %v77 = vld [vmem:[#allocation5 + $0x30] sm:$0xf]
    %v78 = vld [vmem:[#allocation5 + $0x34] sm:$0xf]
    %v79 = vld [vmem:[#allocation5 + $0x38] sm:$0xf]
    %v80 = vld [vmem:[#allocation5 + $0x3c] sm:$0xf]
    %v81 = vld [vmem:[%s2] sm:$0x1]
    %v83 = vlaneseq
    %v84 = vshrl.u32 %v83, 7
    %v85 = vsub.s32 0, %v84
    %v86 = vrot.slane %v81, %v85
    %v90 = vunpack.c.l.b16 %v63
    %v91 = vunpack.c.l.b16 %v64
    %v92 = vpack.c.b16 %v91, %v90
    %v110 = vunpack.c.l.b16 %v65
    %v111 = vunpack.c.l.b16 %v66
    %v112 = vunpack.c.l.b16 %v67
    %v113 = vunpack.c.l.b16 %v68
    %v114 = vunpack.c.l.b16 %v69
    %v115 = vunpack.c.l.b16 %v70
    %v116 = vunpack.c.l.b16 %v71
    %v117 = vunpack.c.l.b16 %v72
    %v118 = vunpack.c.l.b16 %v73
    %v119 = vunpack.c.l.b16 %v74
    %v120 = vunpack.c.l.b16 %v75
    %v121 = vunpack.c.l.b16 %v76
    %v122 = vunpack.c.l.b16 %v77
    %v123 = vunpack.c.l.b16 %v78
    %v124 = vunpack.c.l.b16 %v79
    %v125 = vunpack.c.l.b16 %v80
    %v126 = vpack.c.b16 %v111, %v110
    %v127 = vpack.c.b16 %v113, %v112
    %v128 = vpack.c.b16 %v115, %v114
    %v129 = vpack.c.b16 %v117, %v116
    %v130 = vpack.c.b16 %v119, %v118
    %v131 = vpack.c.b16 %v121, %v120
    %v132 = vpack.c.b16 %v123, %v122
    %v133 = vpack.c.b16 %v125, %v124
    %142 = vmatprep.subr.bf16.mxu0 0
    %143 = vmatpush1.bf16.msra.mxu0 %v126
    %144 = vmatprep.subr.bf16.mxu0 0
    %145 = vmatpush1.bf16.msra.mxu0 %v127
    %146 = vmatprep.subr.bf16.mxu0 0
    %147 = vmatpush1.bf16.msra.mxu0 %v128
    %148 = vmatprep.subr.bf16.mxu0 0
    %149 = vmatpush1.bf16.msra.mxu0 %v129
    %150 = vmatprep.subr.bf16.mxu0 0
    %151 = vmatpush1.bf16.msra.mxu0 %v130
    %152 = vmatprep.subr.bf16.mxu0 0
    %153 = vmatpush1.bf16.msra.mxu0 %v131
    %154 = vmatprep.subr.bf16.mxu0 0
    %155 = vmatpush1.bf16.msra.mxu0 %v132
    %156 = vmatprep.subr.bf16.mxu0 0
    %157 = vmatpush1.bf16.msra.mxu0 %v133
    %158 = vmatprep.subr.bf16.mxu0 0
    %159 = vmatpush1.bf16.msra.mxu0 0
    %160 = vmatprep.subr.bf16.mxu0 0
    %161 = vmatpush1.bf16.msra.mxu0 0
    %162 = vmatprep.subr.bf16.mxu0 0
    %163 = vmatpush1.bf16.msra.mxu0 0
    %164 = vmatprep.subr.bf16.mxu0 0
    %165 = vmatpush1.bf16.msra.mxu0 0
    %166 = vmatprep.subr.bf16.mxu0 0
    %167 = vmatpush1.bf16.msra.mxu0 0
    %168 = vmatprep.subr.bf16.mxu0 0
    %169 = vmatpush1.bf16.msra.mxu0 0
    %170 = vmatprep.subr.bf16.mxu0 0
    %171 = vmatpush1.bf16.msra.mxu0 0
    %172 = vmatprep.subr.bf16.mxu0 0
    %173 = vmatpush1.bf16.msra.mxu0 0
    %174 = vmatprep.mubr.bf16.mxu0 0
    %175 = vmatmul.mubr.bf16.gmra.mrb[0].mxu0 %v92
    %v176 = vpop.f32.mrb[0].mxu0
    %v177 = vadd.f32 %v86, %v176
    %v178 = vpop.f32.mrb[0].mxu0
    %v179 = vpop.f32.mrb[0].mxu0
    %v180 = vadd.f32 %v86, %v179
    %v181 = vpop.f32.mrb[0].mxu0
    %182 = vdwg.mxu0
    %v183 = vmax.f32 %v177, 0.0
    %v184 = vmax.f32 %v180, 0.0
    %v185 = vpack.c.bf16 %v184, %v183
    %v186 = vld [vmem:[#allocation7] sm:$0xf]
    %v187 = vld [vmem:[#allocation7 + $0x4] sm:$0xf]
    %v188 = vld [vmem:[#allocation7 + $0x8] sm:$0xf]
    %v189 = vld [vmem:[#allocation7 + $0xc] sm:$0xf]
    %v190 = vld [vmem:[#allocation7 + $0x10] sm:$0xf]
    %v191 = vld [vmem:[#allocation7 + $0x14] sm:$0xf]
    %v192 = vld [vmem:[#allocation7 + $0x18] sm:$0xf]
    %v193 = vld [vmem:[#allocation7 + $0x1c] sm:$0xf]
    %v194 = vld [vmem:[#allocation7 + $0x20] sm:$0xf]
    %v195 = vld [vmem:[#allocation7 + $0x24] sm:$0xf]
    %v196 = vld [vmem:[#allocation7 + $0x28] sm:$0xf]
    %v197 = vld [vmem:[#allocation7 + $0x2c] sm:$0xf]
    %v198 = vld [vmem:[#allocation7 + $0x30] sm:$0xf]
    %v199 = vld [vmem:[#allocation7 + $0x34] sm:$0xf]
    %v200 = vld [vmem:[#allocation7 + $0x38] sm:$0xf]
    %v201 = vld [vmem:[#allocation7 + $0x3c] sm:$0xf]
    %v202 = vld [vmem:[%s4] sm:$0x1]
    %v204 = vlaneseq
    %v205 = vshrl.u32 %v204, 7
    %v206 = vsub.s32 0, %v205
    %v207 = vrot.slane %v202, %v206
    %v225 = vunpack.c.l.b16 %v186
    %v226 = vunpack.c.l.b16 %v187
    %v227 = vunpack.c.l.b16 %v188
    %v228 = vunpack.c.l.b16 %v189
    %v229 = vunpack.c.l.b16 %v190
    %v230 = vunpack.c.l.b16 %v191
    %v231 = vunpack.c.l.b16 %v192
    %v232 = vunpack.c.l.b16 %v193
    %v233 = vunpack.c.l.b16 %v194
    %v234 = vunpack.c.l.b16 %v195
    %v235 = vunpack.c.l.b16 %v196
    %v236 = vunpack.c.l.b16 %v197
    %v237 = vunpack.c.l.b16 %v198
    %v238 = vunpack.c.l.b16 %v199
    %v239 = vunpack.c.l.b16 %v200
    %v240 = vunpack.c.l.b16 %v201
    %v241 = vpack.c.b16 %v226, %v225
    %v242 = vpack.c.b16 %v228, %v227
    %v243 = vpack.c.b16 %v230, %v229
    %v244 = vpack.c.b16 %v232, %v231
    %v245 = vpack.c.b16 %v234, %v233
    %v246 = vpack.c.b16 %v236, %v235
    %v247 = vpack.c.b16 %v238, %v237
    %v248 = vpack.c.b16 %v240, %v239
    %257 = vmatprep.subr.bf16.mxu0 0
    %258 = vmatpush1.bf16.msra.mxu0 %v241
    %259 = vmatprep.subr.bf16.mxu0 0
    %260 = vmatpush1.bf16.msra.mxu0 %v242
    %261 = vmatprep.subr.bf16.mxu0 0
    %262 = vmatpush1.bf16.msra.mxu0 %v243
    %263 = vmatprep.subr.bf16.mxu0 0
    %264 = vmatpush1.bf16.msra.mxu0 %v244
    %265 = vmatprep.subr.bf16.mxu0 0
    %266 = vmatpush1.bf16.msra.mxu0 %v245
    %267 = vmatprep.subr.bf16.mxu0 0
    %268 = vmatpush1.bf16.msra.mxu0 %v246
    %269 = vmatprep.subr.bf16.mxu0 0
    %270 = vmatpush1.bf16.msra.mxu0 %v247
    %271 = vmatprep.subr.bf16.mxu0 0
    %272 = vmatpush1.bf16.msra.mxu0 %v248
    %273 = vmatprep.subr.bf16.mxu0 0
    %274 = vmatpush1.bf16.msra.mxu0 0
    %275 = vmatprep.subr.bf16.mxu0 0
    %276 = vmatpush1.bf16.msra.mxu0 0
    %277 = vmatprep.subr.bf16.mxu0 0
    %278 = vmatpush1.bf16.msra.mxu0 0
    %279 = vmatprep.subr.bf16.mxu0 0
    %280 = vmatpush1.bf16.msra.mxu0 0
    %281 = vmatprep.subr.bf16.mxu0 0
    %282 = vmatpush1.bf16.msra.mxu0 0
    %283 = vmatprep.subr.bf16.mxu0 0
    %284 = vmatpush1.bf16.msra.mxu0 0
    %285 = vmatprep.subr.bf16.mxu0 0
    %286 = vmatpush1.bf16.msra.mxu0 0
    %287 = vmatprep.subr.bf16.mxu0 0
    %288 = vmatpush1.bf16.msra.mxu0 0
    %289 = vmatprep.mubr.bf16.mxu0 0
    %290 = vmatmul.mubr.bf16.gmra.mrb[0].mxu0 %v185
    %v291 = vpop.f32.mrb[0].mxu0
    %v292 = vadd.f32 %v207, %v291
    %v293 = vpop.f32.mrb[0].mxu0
    %v294 = vpop.f32.mrb[0].mxu0
    %v295 = vadd.f32 %v207, %v294
    %v296 = vpop.f32.mrb[0].mxu0
    %297 = vdwg.mxu0
    %298 = vst [vmem:[#allocation8] sm:$0xff] %v292
    %299 = vst [vmem:[#allocation8 + $0x8] sm:$0xff] %v295
    // Predicated region
    $region34: #{tpu_custom_call.1} parent=1 // pred_check
      _
    $region35: #{tpu_custom_call.1} parent=1 // pred_check_branch
      %301 = sbr.rel (0) target = $region37
    $region36: #{tpu_custom_call.1} parent=1 // pred_region
      %s303 = ssub.s32 256, 256
      %304 = vsyncadd [#allocation4], %s303
      %s305 = sshll.u32 [#allocation8], 4
      %s306 = int_to_ptr.vmem [resolvable:$true] %s305
      %311 = dma.vmem_to_hbm [thread:$0]  %s306, 256, %s5, [#allocation4], 128, 128, 8
    $region37: #{tpu_custom_call.1} parent=1 // pred_fallthru
      _
    // Predicated region
    $region38: #{tpu_custom_call.1} parent=1 // pred_check
      _
    $region39: #{tpu_custom_call.1} parent=1 // pred_check_branch
      %313 = sbr.rel (0) target = $region41
    $region40: #{tpu_custom_call.1} parent=1 // pred_region
      %314 = dma.done [#allocation4], 256
    $region41: #{tpu_custom_call.1} parent=1 // pred_fallthru
      _
    %315 = vsyncpa [#allocation3], 1
    %316 = vsyncpa [#allocation6], 1
    %317 = vsyncpa [#allocation4], 1

</llo_original>
